<compile_context>
chip_gen: v7x
topology: tpu7x:2x2x1
jax: 0.10.0
libtpu: 0.0.40
codegen_flags: <defaults>
</compile_context>

<pallas_src>
import functools

import jax
import jax.numpy as jnp
from jax.experimental import pallas as pl
from jax.experimental.pallas import tpu as pltpu

_LANE = 128
_SUBLANE = 8
_IN_FEATURES = 2048
_TILE_M = 256           # M-tile for the gridded path
_GRIDLESS_MAX_M = 512   # below this, a single block is cheapest (no grid overhead)


def _round_up(x, m):
    return (x + m - 1) // m * m


def _linear_sigmoid_kernel(x_ref, w_ref, b_ref, o_ref):
    # x_ref: (TM, K) bf16, w_ref: (K, N) bf16, b_ref: (1, N) f32, o_ref: (TM, N) f32
    acc = jnp.dot(x_ref[...], w_ref[...], preferred_element_type=jnp.float32)
    acc = acc + b_ref[...]
    # sigmoid(x) = 1 / (1 + exp(-x)); exp and approx reciprocal both use the
    # EUP slot, keeping the VPU free.
    o_ref[...] = pl.reciprocal(1.0 + jnp.exp(-acc), approx=True).astype(o_ref.dtype)


@functools.partial(jax.jit, static_argnames=("num_classes",))
def _forward_stacked(x_all, w_t_pad, b_pad, *, num_classes):
    """x_all: (M, 2048) f32 stacked/flattened inputs -> (M, num_classes) f32."""
    M, K = x_all.shape
    N = w_t_pad.shape[1]  # already padded to a multiple of 128 lanes

    if M <= _GRIDLESS_MAX_M:
        # Single VMEM-resident block; pad rows to a full sublane multiple.
        M_pad = _round_up(max(M, _SUBLANE), _SUBLANE)
        x_pad = jnp.zeros((M_pad, K), jnp.bfloat16).at[:M].set(
            x_all.astype(jnp.bfloat16))
        out = pl.pallas_call(
            _linear_sigmoid_kernel,
            out_shape=jax.ShapeDtypeStruct((M_pad, N), jnp.float32),
            in_specs=[
                pl.BlockSpec((M_pad, K), lambda: (0, 0)),
                pl.BlockSpec((K, N), lambda: (0, 0)),
                pl.BlockSpec((1, N), lambda: (0, 0)),
            ],
            out_specs=pl.BlockSpec((M_pad, N), lambda: (0, 0)),
        )(x_pad, w_t_pad, b_pad)
        return out[:M, :num_classes]

    # Large stacked batch: tile over M.  Weight / bias block indices are
    # constant across the grid, so they stay VMEM-resident (DMA'd once).
    M_pad = _round_up(M, _TILE_M)
    x_pad = jnp.zeros((M_pad, K), jnp.bfloat16).at[:M].set(
        x_all.astype(jnp.bfloat16))
    out = pl.pallas_call(
        _linear_sigmoid_kernel,
        out_shape=jax.ShapeDtypeStruct((M_pad, N), jnp.float32),
        grid=(M_pad // _TILE_M,),
        in_specs=[
            pl.BlockSpec((_TILE_M, K), lambda i: (i, 0)),
            pl.BlockSpec((K, N), lambda i: (0, 0)),
            pl.BlockSpec((1, N), lambda i: (0, 0)),
        ],
        out_specs=pl.BlockSpec((_TILE_M, N), lambda i: (i, 0)),
        compiler_params=pltpu.CompilerParams(
            dimension_semantics=("parallel",)),
    )(x_pad, w_t_pad, b_pad)
    return out[:M, :num_classes]


class HRNetClassificationPallas:
    """JAX/Pallas re-implementation of the PyTorch HRNetClassification module."""

    IN_FEATURES = _IN_FEATURES

    def __init__(self, num_classes, key):
        # Deterministic init matching nn.Linear default:
        # weight, bias ~ U(-1/sqrt(in_features), 1/sqrt(in_features))
        kw, kb = jax.random.split(key)
        bound = 1.0 / (self.IN_FEATURES ** 0.5)
        w = jax.random.uniform(
            kw, (num_classes, self.IN_FEATURES), jnp.float32, -bound, bound)
        b = jax.random.uniform(kb, (num_classes,), jnp.float32, -bound, bound)

        self.num_classes = num_classes
        n_pad = _round_up(max(num_classes, _LANE), _LANE)

        # PyTorch weight is (NC, 2048); store transposed so the kernel does a
        # plain x @ W_t, zero-padded to 128 lanes, bf16 for the MXU.
        w_t = jnp.transpose(w)                                # (2048, NC) f32
        self.w_f32 = w_t                                      # for reference check
        self.b_f32 = b
        self.w_t_pad = (jnp.zeros((self.IN_FEATURES, n_pad), jnp.bfloat16)
                        .at[:, :num_classes].set(w_t.astype(jnp.bfloat16)))
        self.b_pad = (jnp.zeros((1, n_pad), jnp.float32)
                      .at[:, :num_classes].set(b.reshape(1, num_classes)))

    def __call__(self, inputs):
        # Flatten every input (nn.Flatten: row-major over (C, H, W)) and fuse
        # the whole list into a single Pallas call.
        batch_sizes = [int(x.shape[0]) for x in inputs]
        flats = []
        for x in inputs:
            f = x.reshape(x.shape[0], -1)
            assert f.shape[1] == self.IN_FEATURES, f.shape
            flats.append(f)
        x_all = jnp.concatenate(flats, axis=0)                # (sum(B), 2048)

        out_all = _forward_stacked(
            x_all, self.w_t_pad, self.b_pad, num_classes=self.num_classes)

        outs, off = [], 0
        for bsz in batch_sizes:
            outs.append(out_all[off:off + bsz])
            off += bsz
        return outs


if __name__ == "__main__":
    key = jax.random.PRNGKey(0)
    k_model, k0, k1, k2 = jax.random.split(key, 4)

    num_classes = 10
    model = HRNetClassificationPallas(num_classes, k_model)

    # Small NCHW inputs whose flattened feature size is 2048: 128*4*4 = 2048.
    batch = 2
    inputs = [
        jax.random.normal(k0, (batch, 128, 4, 4), jnp.float32),
        jax.random.normal(k1, (batch, 128, 4, 4), jnp.float32),
        jax.random.normal(k2, (batch, 128, 4, 4), jnp.float32),
    ]

    outs = model(inputs)
    outs = [jax.block_until_ready(o) for o in outs]

    # Reference check in plain JAX (f32 math, same semantics as the PyTorch
    # module); tolerance accounts for bf16 MXU operands / approx reciprocal.
    ok = True
    for x, o in zip(inputs, outs):
        flat = x.reshape(batch, -1)
        ref = jax.nn.sigmoid(flat @ model.w_f32 + model.b_f32)
        ok &= bool(jnp.allclose(o, ref, atol=1e-2, rtol=0.0))
        ok &= o.shape == (batch, num_classes)

    if ok:
        print("KERNEL_OK")
    else:
        print("KERNEL_MISMATCH")
</pallas_src>

<mosaic_0001>
module attributes {stable_mosaic.version = 11 : i64} {
  func.func @_linear_sigmoid_kernel(%arg0: memref<8x2048xbf16, #tpu.memory_space<vmem>>, %arg1: memref<2048x128xbf16, #tpu.memory_space<vmem>>, %arg2: memref<1x128xf32, #tpu.memory_space<vmem>>, %arg3: memref<8x128xf32, #tpu.memory_space<vmem>>) attributes {dimension_semantics = [], scalar_prefetch = 0 : i64, scratch_operands = 0 : i64, tpu.core_type = #tpu.core_type<tc>} {
    %c0 = arith.constant 0 : index
    %c0_0 = arith.constant 0 : index
    %0 = vector.load %arg0[%c0, %c0_0] : memref<8x2048xbf16, #tpu.memory_space<vmem>>, vector<8x2048xbf16>
    %c0_1 = arith.constant 0 : index
    %c0_2 = arith.constant 0 : index
    %1 = vector.load %arg1[%c0_1, %c0_2] : memref<2048x128xbf16, #tpu.memory_space<vmem>>, vector<2048x128xbf16>
    %cst = arith.constant dense<0.000000e+00> : vector<8x128xf32>
    %2 = tpu.matmul %0, %1, %cst {dimension_numbers = #tpu.dot_dimension_numbers<[1], [0], [0], [1], [0, 0, 1, 1], [], []>} : vector<8x2048xbf16>, vector<2048x128xbf16>, vector<8x128xf32> -> vector<8x128xf32>
    %c0_3 = arith.constant 0 : index
    %c0_4 = arith.constant 0 : index
    %3 = vector.load %arg2[%c0_3, %c0_4] : memref<1x128xf32, #tpu.memory_space<vmem>>, vector<1x128xf32>
    %4 = vector.broadcast %3 : vector<1x128xf32> to vector<8x128xf32>
    %5 = arith.addf %2, %4 : vector<8x128xf32>
    %cst_5 = arith.constant 0.000000e+00 : f32
    %6 = vector.broadcast %cst_5 : f32 to vector<8x128xf32>
    %7 = arith.subf %6, %5 : vector<8x128xf32>
    %8 = math.exp %7 : vector<8x128xf32>
    %cst_6 = arith.constant 1.000000e+00 : f32
    %9 = vector.broadcast %cst_6 : f32 to vector<8x128xf32>
    %10 = arith.addf %9, %8 : vector<8x128xf32>
    %11 = tpu.reciprocal %10 {approx = true} : vector<8x128xf32> -> vector<8x128xf32>
    %c0_7 = arith.constant 0 : index
    %c0_8 = arith.constant 0 : index
    %12 = vector.load %arg3[%c0_7, %c0_8] : memref<8x128xf32, #tpu.memory_space<vmem>>, vector<8x128xf32>
    tpu.vector_store %arg3[%c0_7, %c0_8], %11 {strides = array<i32>} : memref<8x128xf32, #tpu.memory_space<vmem>>, vector<8x128xf32>,
    return
  }
}

</mosaic_0001>

<llo_original>
// kernel: _forward_stacked.1
$region0: #{_forward_stacked.1}
  #allocation0 [shape = 'u32[]', space=smem, size = 0x4, offset = 0x4, fixed_abs, tag = 'smem constant byte address 0x4 - core index']
  #allocation1 [shape = 'u32[144,128]{1,0:T(1,128)}', space=vmem, size = 0x12000, scoped, tag = 'internal scratch']
  %s0 = inlined_call_operand.vmem [shape: bf16[8,2048], index: 0, kind: input, shape index: {}]
  %s1 = inlined_call_operand.hbm [shape: bf16[2048,128], index: 1, kind: input, shape index: {}]
  %s2 = inlined_call_operand.vmem [shape: f32[1,128], index: 2, kind: input, shape index: {}]
  %s3 = inlined_call_operand.hbm [shape: f32[8,128], index: 3, kind: output, shape index: {}]
  %s4 = sld [smem:[#allocation0]]
  $region26: #{_forward_stacked.1} parent=0
    _
  %s6 = ssub.s32 1, %s4
  %s7 = scalar_select 0, %s6, %s4
  $region1: #{_forward_stacked.1} parent=0
    #allocation2 [shape = 'u8[524288]{0}', space=vmem, size = 0x80000, scoped, tag = 'input window, operand 1, single buffered']
    #allocation3 [shape = 's32[1]{0}', space=sflag, size = 0x4, scoped, tag = 'scoped memory for _forward_stacked.1']
    #allocation4 [shape = 's32[1]{0}', space=sflag, size = 0x4, scoped, tag = 'scoped memory for _forward_stacked.1']
    #allocation5 [shape = 'u8[4096]{0}', space=vmem, size = 0x1000, scoped, tag = 'output window, operand 0, single buffered']
    %8 = vsyncpa [#allocation3], 0
    %9 = vsyncpa [#allocation4], 0
    // Predicated region
    $region2: #{_forward_stacked.1} parent=1 // pred_check
      _
    $region3: #{_forward_stacked.1} parent=1 // pred_check_branch
      %11 = sbr.rel (0) target = $region5
    $region4: #{_forward_stacked.1} parent=1 // pred_region
      _
    $region5: #{_forward_stacked.1} parent=1 // pred_fallthru
      _
    // Predicated region
    $region6: #{_forward_stacked.1} parent=1 // pred_check
      _
    $region7: #{_forward_stacked.1} parent=1 // pred_check_branch
      %13 = sbr.rel (0) target = $region9
    $region8: #{_forward_stacked.1} parent=1 // pred_region
      %s15 = ssub.s32 16384, 16384
      %16 = vsyncadd [#allocation3], %s15
      %s17 = sshll.u32 [#allocation2], 4
      %s18 = int_to_ptr.vmem [resolvable:$true] %s17
      %23 = dma.hbm_to_vmem [thread:$0]  %s1, 16384, %s18, [#allocation3], 64, 64, 4
    $region9: #{_forward_stacked.1} parent=1 // pred_fallthru
      _
    // Predicated region
    $region10: #{_forward_stacked.1} parent=1 // pred_check
      _
    $region11: #{_forward_stacked.1} parent=1 // pred_check_branch
      %25 = sbr.rel (0) target = $region13
    $region12: #{_forward_stacked.1} parent=1 // pred_region
      _
    $region13: #{_forward_stacked.1} parent=1 // pred_fallthru
      _
    // Predicated region
    $region14: #{_forward_stacked.1} parent=1 // pred_check
      _
    $region15: #{_forward_stacked.1} parent=1 // pred_check_branch
      %27 = sbr.rel (0) target = $region17
    $region16: #{_forward_stacked.1} parent=1 // pred_region
      %28 = dma.done [#allocation3], 16384
    $region17: #{_forward_stacked.1} parent=1 // pred_fallthru
      _
    %v30 = vld [vmem:[%s0] sm:$0xff]
    %v31 = vld [vmem:[%s0 + $0x8] sm:$0xff]
    %v32 = vld [vmem:[%s0 + $0x10] sm:$0xff]
    %v33 = vld [vmem:[%s0 + $0x18] sm:$0xff]
    %v34 = vld [vmem:[%s0 + $0x20] sm:$0xff]
    %v35 = vld [vmem:[%s0 + $0x28] sm:$0xff]
    %v36 = vld [vmem:[%s0 + $0x30] sm:$0xff]
    %v37 = vld [vmem:[%s0 + $0x38] sm:$0xff]
    %v38 = vld [vmem:[#allocation2] sm:$0xf]
    %v39 = vld [vmem:[#allocation2 + $0x4] sm:$0xf]
    %v40 = vld [vmem:[#allocation2 + $0x8] sm:$0xf]
    %v41 = vld [vmem:[#allocation2 + $0xc] sm:$0xf]
    %v42 = vld [vmem:[#allocation2 + $0x10] sm:$0xf]
    %v43 = vld [vmem:[#allocation2 + $0x14] sm:$0xf]
    %v44 = vld [vmem:[#allocation2 + $0x18] sm:$0xf]
    %v45 = vld [vmem:[#allocation2 + $0x1c] sm:$0xf]
    %v46 = vld [vmem:[#allocation2 + $0x20] sm:$0xf]
    %v47 = vld [vmem:[#allocation2 + $0x24] sm:$0xf]
    %v48 = vld [vmem:[#allocation2 + $0x28] sm:$0xf]
    %v49 = vld [vmem:[#allocation2 + $0x2c] sm:$0xf]
    %v50 = vld [vmem:[#allocation2 + $0x30] sm:$0xf]
    %v51 = vld [vmem:[#allocation2 + $0x34] sm:$0xf]
    %v52 = vld [vmem:[#allocation2 + $0x38] sm:$0xf]
    %v53 = vld [vmem:[#allocation2 + $0x3c] sm:$0xf]
    %v54 = vld [vmem:[#allocation2 + $0x40] sm:$0xf]
    %v55 = vld [vmem:[#allocation2 + $0x44] sm:$0xf]
    %v56 = vld [vmem:[#allocation2 + $0x48] sm:$0xf]
    %v57 = vld [vmem:[#allocation2 + $0x4c] sm:$0xf]
    %v58 = vld [vmem:[#allocation2 + $0x50] sm:$0xf]
    %v59 = vld [vmem:[#allocation2 + $0x54] sm:$0xf]
    %v60 = vld [vmem:[#allocation2 + $0x58] sm:$0xf]
    %v61 = vld [vmem:[#allocation2 + $0x5c] sm:$0xf]
    %v62 = vld [vmem:[#allocation2 + $0x60] sm:$0xf]
    %v63 = vld [vmem:[#allocation2 + $0x64] sm:$0xf]
    %v64 = vld [vmem:[#allocation2 + $0x68] sm:$0xf]
    %v65 = vld [vmem:[#allocation2 + $0x6c] sm:$0xf]
    %v66 = vld [vmem:[#allocation2 + $0x70] sm:$0xf]
    %v67 = vld [vmem:[#allocation2 + $0x74] sm:$0xf]
    %v68 = vld [vmem:[#allocation2 + $0x78] sm:$0xf]
    %v69 = vld [vmem:[#allocation2 + $0x7c] sm:$0xf]
    %v70 = vld [vmem:[#allocation2 + $0x80] sm:$0xf]
    %v71 = vld [vmem:[#allocation2 + $0x84] sm:$0xf]
    %v72 = vld [vmem:[#allocation2 + $0x88] sm:$0xf]
    %v73 = vld [vmem:[#allocation2 + $0x8c] sm:$0xf]
    %v74 = vld [vmem:[#allocation2 + $0x90] sm:$0xf]
    %v75 = vld [vmem:[#allocation2 + $0x94] sm:$0xf]
    %v76 = vld [vmem:[#allocation2 + $0x98] sm:$0xf]
    %v77 = vld [vmem:[#allocation2 + $0x9c] sm:$0xf]
    %v78 = vld [vmem:[#allocation2 + $0xa0] sm:$0xf]
    %v79 = vld [vmem:[#allocation2 + $0xa4] sm:$0xf]
    %v80 = vld [vmem:[#allocation2 + $0xa8] sm:$0xf]
    %v81 = vld [vmem:[#allocation2 + $0xac] sm:$0xf]
    %v82 = vld [vmem:[#allocation2 + $0xb0] sm:$0xf]
    %v83 = vld [vmem:[#allocation2 + $0xb4] sm:$0xf]
    %v84 = vld [vmem:[#allocation2 + $0xb8] sm:$0xf]
    %v85 = vld [vmem:[#allocation2 + $0xbc] sm:$0xf]
    %v86 = vld [vmem:[#allocation2 + $0xc0] sm:$0xf]
    %v87 = vld [vmem:[#allocation2 + $0xc4] sm:$0xf]
    %v88 = vld [vmem:[#allocation2 + $0xc8] sm:$0xf]
    %v89 = vld [vmem:[#allocation2 + $0xcc] sm:$0xf]
    %v90 = vld [vmem:[#allocation2 + $0xd0] sm:$0xf]
    %v91 = vld [vmem:[#allocation2 + $0xd4] sm:$0xf]
    %v92 = vld [vmem:[#allocation2 + $0xd8] sm:$0xf]
    %v93 = vld [vmem:[#allocation2 + $0xdc] sm:$0xf]
    %v94 = vld [vmem:[#allocation2 + $0xe0] sm:$0xf]
    %v95 = vld [vmem:[#allocation2 + $0xe4] sm:$0xf]
    %v96 = vld [vmem:[#allocation2 + $0xe8] sm:$0xf]
    %v97 = vld [vmem:[#allocation2 + $0xec] sm:$0xf]
    %v98 = vld [vmem:[#allocation2 + $0xf0] sm:$0xf]
    %v99 = vld [vmem:[#allocation2 + $0xf4] sm:$0xf]
    %v100 = vld [vmem:[#allocation2 + $0xf8] sm:$0xf]
    %v101 = vld [vmem:[#allocation2 + $0xfc] sm:$0xf]
    %v102 = vld [vmem:[#allocation2 + $0x100] sm:$0xf]
    %v103 = vld [vmem:[#allocation2 + $0x104] sm:$0xf]
    %v104 = vld [vmem:[#allocation2 + $0x108] sm:$0xf]
    %v105 = vld [vmem:[#allocation2 + $0x10c] sm:$0xf]
    %v106 = vld [vmem:[#allocation2 + $0x110] sm:$0xf]
    %v107 = vld [vmem:[#allocation2 + $0x114] sm:$0xf]
    %v108 = vld [vmem:[#allocation2 + $0x118] sm:$0xf]
    %v109 = vld [vmem:[#allocation2 + $0x11c] sm:$0xf]
    %v110 = vld [vmem:[#allocation2 + $0x120] sm:$0xf]
    %v111 = vld [vmem:[#allocation2 + $0x124] sm:$0xf]
    %v112 = vld [vmem:[#allocation2 + $0x128] sm:$0xf]
    %v113 = vld [vmem:[#allocation2 + $0x12c] sm:$0xf]
    %v114 = vld [vmem:[#allocation2 + $0x130] sm:$0xf]
    %v115 = vld [vmem:[#allocation2 + $0x134] sm:$0xf]
    %v116 = vld [vmem:[#allocation2 + $0x138] sm:$0xf]
    %v117 = vld [vmem:[#allocation2 + $0x13c] sm:$0xf]
    %v118 = vld [vmem:[#allocation2 + $0x140] sm:$0xf]
    %v119 = vld [vmem:[#allocation2 + $0x144] sm:$0xf]
    %v120 = vld [vmem:[#allocation2 + $0x148] sm:$0xf]
    %v121 = vld [vmem:[#allocation2 + $0x14c] sm:$0xf]
    %v122 = vld [vmem:[#allocation2 + $0x150] sm:$0xf]
    %v123 = vld [vmem:[#allocation2 + $0x154] sm:$0xf]
    %v124 = vld [vmem:[#allocation2 + $0x158] sm:$0xf]
    %v125 = vld [vmem:[#allocation2 + $0x15c] sm:$0xf]
    %v126 = vld [vmem:[#allocation2 + $0x160] sm:$0xf]
    %v127 = vld [vmem:[#allocation2 + $0x164] sm:$0xf]
    %v128 = vld [vmem:[#allocation2 + $0x168] sm:$0xf]
    %v129 = vld [vmem:[#allocation2 + $0x16c] sm:$0xf]
    %v130 = vld [vmem:[#allocation2 + $0x170] sm:$0xf]
    %v131 = vld [vmem:[#allocation2 + $0x174] sm:$0xf]
    %v132 = vld [vmem:[#allocation2 + $0x178] sm:$0xf]
    %v133 = vld [vmem:[#allocation2 + $0x17c] sm:$0xf]
    %v134 = vld [vmem:[#allocation2 + $0x180] sm:$0xf]
    %v135 = vld [vmem:[#allocation2 + $0x184] sm:$0xf]
    %v136 = vld [vmem:[#allocation2 + $0x188] sm:$0xf]
    %v137 = vld [vmem:[#allocation2 + $0x18c] sm:$0xf]
    %v138 = vld [vmem:[#allocation2 + $0x190] sm:$0xf]
    %v139 = vld [vmem:[#allocation2 + $0x194] sm:$0xf]
    %v140 = vld [vmem:[#allocation2 + $0x198] sm:$0xf]
    %v141 = vld [vmem:[#allocation2 + $0x19c] sm:$0xf]
    %v142 = vld [vmem:[#allocation2 + $0x1a0] sm:$0xf]
    %v143 = vld [vmem:[#allocation2 + $0x1a4] sm:$0xf]
    %v144 = vld [vmem:[#allocation2 + $0x1a8] sm:$0xf]
    %v145 = vld [vmem:[#allocation2 + $0x1ac] sm:$0xf]
    %v146 = vld [vmem:[#allocation2 + $0x1b0] sm:$0xf]
    %v147 = vld [vmem:[#allocation2 + $0x1b4] sm:$0xf]
    %v148 = vld [vmem:[#allocation2 + $0x1b8] sm:$0xf]
    %v149 = vld [vmem:[#allocation2 + $0x1bc] sm:$0xf]
    %v150 = vld [vmem:[#allocation2 + $0x1c0] sm:$0xf]
    %v151 = vld [vmem:[#allocation2 + $0x1c4] sm:$0xf]
    %v152 = vld [vmem:[#allocation2 + $0x1c8] sm:$0xf]
    %v153 = vld [vmem:[#allocation2 + $0x1cc] sm:$0xf]
    %v154 = vld [vmem:[#allocation2 + $0x1d0] sm:$0xf]
    %v155 = vld [vmem:[#allocation2 + $0x1d4] sm:$0xf]
    %v156 = vld [vmem:[#allocation2 + $0x1d8] sm:$0xf]
    %v157 = vld [vmem:[#allocation2 + $0x1dc] sm:$0xf]
    %v158 = vld [vmem:[#allocation2 + $0x1e0] sm:$0xf]
    %v159 = vld [vmem:[#allocation2 + $0x1e4] sm:$0xf]
    %v160 = vld [vmem:[#allocation2 + $0x1e8] sm:$0xf]
    %v161 = vld [vmem:[#allocation2 + $0x1ec] sm:$0xf]
    %v162 = vld [vmem:[#allocation2 + $0x1f0] sm:$0xf]
    %v163 = vld [vmem:[#allocation2 + $0x1f4] sm:$0xf]
    %v164 = vld [vmem:[#allocation2 + $0x1f8] sm:$0xf]
    %v165 = vld [vmem:[#allocation2 + $0x1fc] sm:$0xf]
    %v166 = vld [vmem:[#allocation2 + $0x200] sm:$0xf]
    %v167 = vld [vmem:[#allocation2 + $0x204] sm:$0xf]
    %v168 = vld [vmem:[#allocation2 + $0x208] sm:$0xf]
    %v169 = vld [vmem:[#allocation2 + $0x20c] sm:$0xf]
    %v170 = vld [vmem:[#allocation2 + $0x210] sm:$0xf]
    %v171 = vld [vmem:[#allocation2 + $0x214] sm:$0xf]
    %v172 = vld [vmem:[#allocation2 + $0x218] sm:$0xf]
    %v173 = vld [vmem:[#allocation2 + $0x21c] sm:$0xf]
    %v174 = vld [vmem:[#allocation2 + $0x220] sm:$0xf]
    %v175 = vld [vmem:[#allocation2 + $0x224] sm:$0xf]
    %v176 = vld [vmem:[#allocation2 + $0x228] sm:$0xf]
    %v177 = vld [vmem:[#allocation2 + $0x22c] sm:$0xf]
    %v178 = vld [vmem:[#allocation2 + $0x230] sm:$0xf]
    %v179 = vld [vmem:[#allocation2 + $0x234] sm:$0xf]
    %v180 = vld [vmem:[#allocation2 + $0x238] sm:$0xf]
    %v181 = vld [vmem:[#allocation2 + $0x23c] sm:$0xf]
    %v182 = vld [vmem:[#allocation2 + $0x240] sm:$0xf]
    %v183 = vld [vmem:[#allocation2 + $0x244] sm:$0xf]
    %v184 = vld [vmem:[#allocation2 + $0x248] sm:$0xf]
    %v185 = vld [vmem:[#allocation2 + $0x24c] sm:$0xf]
    %v186 = vld [vmem:[#allocation2 + $0x250] sm:$0xf]
    %v187 = vld [vmem:[#allocation2 + $0x254] sm:$0xf]
    %v188 = vld [vmem:[#allocation2 + $0x258] sm:$0xf]
    %v189 = vld [vmem:[#allocation2 + $0x25c] sm:$0xf]
    %v190 = vld [vmem:[#allocation2 + $0x260] sm:$0xf]
    %v191 = vld [vmem:[#allocation2 + $0x264] sm:$0xf]
    %v192 = vld [vmem:[#allocation2 + $0x268] sm:$0xf]
    %v193 = vld [vmem:[#allocation2 + $0x26c] sm:$0xf]
    %v194 = vld [vmem:[#allocation2 + $0x270] sm:$0xf]
    %v195 = vld [vmem:[#allocation2 + $0x274] sm:$0xf]
    %v196 = vld [vmem:[#allocation2 + $0x278] sm:$0xf]
    %v197 = vld [vmem:[#allocation2 + $0x27c] sm:$0xf]
    %v198 = vld [vmem:[#allocation2 + $0x280] sm:$0xf]
    %v199 = vld [vmem:[#allocation2 + $0x284] sm:$0xf]
    %v200 = vld [vmem:[#allocation2 + $0x288] sm:$0xf]
    %v201 = vld [vmem:[#allocation2 + $0x28c] sm:$0xf]
    %v202 = vld [vmem:[#allocation2 + $0x290] sm:$0xf]
    %v203 = vld [vmem:[#allocation2 + $0x294] sm:$0xf]
    %v204 = vld [vmem:[#allocation2 + $0x298] sm:$0xf]
    %v205 = vld [vmem:[#allocation2 + $0x29c] sm:$0xf]
    %v206 = vld [vmem:[#allocation2 + $0x2a0] sm:$0xf]
    %v207 = vld [vmem:[#allocation2 + $0x2a4] sm:$0xf]
    %v208 = vld [vmem:[#allocation2 + $0x2a8] sm:$0xf]
    %v209 = vld [vmem:[#allocation2 + $0x2ac] sm:$0xf]
    %v210 = vld [vmem:[#allocation2 + $0x2b0] sm:$0xf]
    %v211 = vld [vmem:[#allocation2 + $0x2b4] sm:$0xf]
    %v212 = vld [vmem:[#allocation2 + $0x2b8] sm:$0xf]
    %v213 = vld [vmem:[#allocation2 + $0x2bc] sm:$0xf]
    %v214 = vld [vmem:[#allocation2 + $0x2c0] sm:$0xf]
    %v215 = vld [vmem:[#allocation2 + $0x2c4] sm:$0xf]
    %v216 = vld [vmem:[#allocation2 + $0x2c8] sm:$0xf]
    %v217 = vld [vmem:[#allocation2 + $0x2cc] sm:$0xf]
    %v218 = vld [vmem:[#allocation2 + $0x2d0] sm:$0xf]
    %v219 = vld [vmem:[#allocation2 + $0x2d4] sm:$0xf]
    %v220 = vld [vmem:[#allocation2 + $0x2d8] sm:$0xf]
    %v221 = vld [vmem:[#allocation2 + $0x2dc] sm:$0xf]
    %v222 = vld [vmem:[#allocation2 + $0x2e0] sm:$0xf]
    %v223 = vld [vmem:[#allocation2 + $0x2e4] sm:$0xf]
    %v224 = vld [vmem:[#allocation2 + $0x2e8] sm:$0xf]
    %v225 = vld [vmem:[#allocation2 + $0x2ec] sm:$0xf]
    %v226 = vld [vmem:[#allocation2 + $0x2f0] sm:$0xf]
    %v227 = vld [vmem:[#allocation2 + $0x2f4] sm:$0xf]
    %v228 = vld [vmem:[#allocation2 + $0x2f8] sm:$0xf]
    %v229 = vld [vmem:[#allocation2 + $0x2fc] sm:$0xf]
    %v230 = vld [vmem:[#allocation2 + $0x300] sm:$0xf]
    %v231 = vld [vmem:[#allocation2 + $0x304] sm:$0xf]
    %v232 = vld [vmem:[#allocation2 + $0x308] sm:$0xf]
    %v233 = vld [vmem:[#allocation2 + $0x30c] sm:$0xf]
    %v234 = vld [vmem:[#allocation2 + $0x310] sm:$0xf]
    %v235 = vld [vmem:[#allocation2 + $0x314] sm:$0xf]
    %v236 = vld [vmem:[#allocation2 + $0x318] sm:$0xf]
    %v237 = vld [vmem:[#allocation2 + $0x31c] sm:$0xf]
    %v238 = vld [vmem:[#allocation2 + $0x320] sm:$0xf]
    %v239 = vld [vmem:[#allocation2 + $0x324] sm:$0xf]
    %v240 = vld [vmem:[#allocation2 + $0x328] sm:$0xf]
    %v241 = vld [vmem:[#allocation2 + $0x32c] sm:$0xf]
    %v242 = vld [vmem:[#allocation2 + $0x330] sm:$0xf]
    %v243 = vld [vmem:[#allocation2 + $0x334] sm:$0xf]
    %v244 = vld [vmem:[#allocation2 + $0x338] sm:$0xf]
    %v245 = vld [vmem:[#allocation2 + $0x33c] sm:$0xf]
    %v246 = vld [vmem:[#allocation2 + $0x340] sm:$0xf]
    %v247 = vld [vmem:[#allocation2 + $0x344] sm:$0xf]
    %v248 = vld [vmem:[#allocation2 + $0x348] sm:$0xf]
    %v249 = vld [vmem:[#allocation2 + $0x34c] sm:$0xf]
    %v250 = vld [vmem:[#allocation2 + $0x350] sm:$0xf]
    %v251 = vld [vmem:[#allocation2 + $0x354] sm:$0xf]
    %v252 = vld [vmem:[#allocation2 + $0x358] sm:$0xf]
    %v253 = vld [vmem:[#allocation2 + $0x35c] sm:$0xf]
    %v254 = vld [vmem:[#allocation2 + $0x360] sm:$0xf]
    %v255 = vld [vmem:[#allocation2 + $0x364] sm:$0xf]
    %v256 = vld [vmem:[#allocation2 + $0x368] sm:$0xf]
    %v257 = vld [vmem:[#allocation2 + $0x36c] sm:$0xf]
    %v258 = vld [vmem:[#allocation2 + $0x370] sm:$0xf]
    %v259 = vld [vmem:[#allocation2 + $0x374] sm:$0xf]
    %v260 = vld [vmem:[#allocation2 + $0x378] sm:$0xf]
    %v261 = vld [vmem:[#allocation2 + $0x37c] sm:$0xf]
    %v262 = vld [vmem:[#allocation2 + $0x380] sm:$0xf]
    %v263 = vld [vmem:[#allocation2 + $0x384] sm:$0xf]
    %v264 = vld [vmem:[#allocation2 + $0x388] sm:$0xf]
    %v265 = vld [vmem:[#allocation2 + $0x38c] sm:$0xf]
    %v266 = vld [vmem:[#allocation2 + $0x390] sm:$0xf]
    %v267 = vld [vmem:[#allocation2 + $0x394] sm:$0xf]
    %v268 = vld [vmem:[#allocation2 + $0x398] sm:$0xf]
    %v269 = vld [vmem:[#allocation2 + $0x39c] sm:$0xf]
    %v270 = vld [vmem:[#allocation2 + $0x3a0] sm:$0xf]
    %v271 = vld [vmem:[#allocation2 + $0x3a4] sm:$0xf]
    %v272 = vld [vmem:[#allocation2 + $0x3a8] sm:$0xf]
    %v273 = vld [vmem:[#allocation2 + $0x3ac] sm:$0xf]
    %v274 = vld [vmem:[#allocation2 + $0x3b0] sm:$0xf]
    %v275 = vld [vmem:[#allocation2 + $0x3b4] sm:$0xf]
    %v276 = vld [vmem:[#allocation2 + $0x3b8] sm:$0xf]
    %v277 = vld [vmem:[#allocation2 + $0x3bc] sm:$0xf]
    %v278 = vld [vmem:[#allocation2 + $0x3c0] sm:$0xf]
    %v279 = vld [vmem:[#allocation2 + $0x3c4] sm:$0xf]
    %v280 = vld [vmem:[#allocation2 + $0x3c8] sm:$0xf]
    %v281 = vld [vmem:[#allocation2 + $0x3cc] sm:$0xf]
    %v282 = vld [vmem:[#allocation2 + $0x3d0] sm:$0xf]
    %v283 = vld [vmem:[#allocation2 + $0x3d4] sm:$0xf]
    %v284 = vld [vmem:[#allocation2 + $0x3d8] sm:$0xf]
    %v285 = vld [vmem:[#allocation2 + $0x3dc] sm:$0xf]
    %v286 = vld [vmem:[#allocation2 + $0x3e0] sm:$0xf]
    %v287 = vld [vmem:[#allocation2 + $0x3e4] sm:$0xf]
    %v288 = vld [vmem:[#allocation2 + $0x3e8] sm:$0xf]
    %v289 = vld [vmem:[#allocation2 + $0x3ec] sm:$0xf]
    %v290 = vld [vmem:[#allocation2 + $0x3f0] sm:$0xf]
    %v291 = vld [vmem:[#allocation2 + $0x3f4] sm:$0xf]
    %v292 = vld [vmem:[#allocation2 + $0x3f8] sm:$0xf]
    %v293 = vld [vmem:[#allocation2 + $0x3fc] sm:$0xf]
    %v294 = vld [vmem:[%s2] sm:$0x1]
    %v296 = vlaneseq
    %v297 = vshrl.u32 %v296, 7
    %v298 = vsub.s32 0, %v297
    %v299 = vrot.slane %v294, %v298
    %v309 = vunpack.c.l.b16 %v30
    %v310 = vunpack.c.h.b16 %v30
    %v311 = vunpack.c.l.b16 %v31
    %v312 = vunpack.c.h.b16 %v31
    %v313 = vunpack.c.l.b16 %v32
    %v314 = vunpack.c.h.b16 %v32
    %v315 = vunpack.c.l.b16 %v33
    %v316 = vunpack.c.h.b16 %v33
    %v317 = vunpack.c.l.b16 %v34
    %v318 = vunpack.c.h.b16 %v34
    %v319 = vunpack.c.l.b16 %v35
    %v320 = vunpack.c.h.b16 %v35
    %v321 = vunpack.c.l.b16 %v36
    %v322 = vunpack.c.h.b16 %v36
    %v323 = vunpack.c.l.b16 %v37
    %v324 = vunpack.c.h.b16 %v37
    %v325 = vpack.c.b16 %v309, %v309
    %v326 = vpack.c.b16 %v310, %v310
    %v327 = vpack.c.b16 %v311, %v311
    %v328 = vpack.c.b16 %v312, %v312
    %v329 = vpack.c.b16 %v313, %v313
    %v330 = vpack.c.b16 %v314, %v314
    %v331 = vpack.c.b16 %v315, %v315
    %v332 = vpack.c.b16 %v316, %v316
    %v333 = vpack.c.b16 %v317, %v317
    %v334 = vpack.c.b16 %v318, %v318
    %v335 = vpack.c.b16 %v319, %v319
    %v336 = vpack.c.b16 %v320, %v320
    %v337 = vpack.c.b16 %v321, %v321
    %v338 = vpack.c.b16 %v322, %v322
    %v339 = vpack.c.b16 %v323, %v323
    %v340 = vpack.c.b16 %v324, %v324
    %v613 = vunpack.c.l.b16 %v38
    %v614 = vunpack.c.l.b16 %v39
    %v615 = vunpack.c.l.b16 %v40
    %v616 = vunpack.c.l.b16 %v41
    %v617 = vunpack.c.l.b16 %v42
    %v618 = vunpack.c.l.b16 %v43
    %v619 = vunpack.c.l.b16 %v44
    %v620 = vunpack.c.l.b16 %v45
    %v621 = vunpack.c.l.b16 %v46
    %v622 = vunpack.c.l.b16 %v47
    %v623 = vunpack.c.l.b16 %v48
    %v624 = vunpack.c.l.b16 %v49
    %v625 = vunpack.c.l.b16 %v50
    %v626 = vunpack.c.l.b16 %v51
    %v627 = vunpack.c.l.b16 %v52
    %v628 = vunpack.c.l.b16 %v53
    %v629 = vunpack.c.l.b16 %v54
    %v630 = vunpack.c.l.b16 %v55
    %v631 = vunpack.c.l.b16 %v56
    %v632 = vunpack.c.l.b16 %v57
    %v633 = vunpack.c.l.b16 %v58
    %v634 = vunpack.c.l.b16 %v59
    %v635 = vunpack.c.l.b16 %v60
    %v636 = vunpack.c.l.b16 %v61
    %v637 = vunpack.c.l.b16 %v62
    %v638 = vunpack.c.l.b16 %v63
    %v639 = vunpack.c.l.b16 %v64
    %v640 = vunpack.c.l.b16 %v65
    %v641 = vunpack.c.l.b16 %v66
    %v642 = vunpack.c.l.b16 %v67
    %v643 = vunpack.c.l.b16 %v68
    %v644 = vunpack.c.l.b16 %v69
    %v645 = vunpack.c.l.b16 %v70
    %v646 = vunpack.c.l.b16 %v71
    %v647 = vunpack.c.l.b16 %v72
    %v648 = vunpack.c.l.b16 %v73
    %v649 = vunpack.c.l.b16 %v74
    %v650 = vunpack.c.l.b16 %v75
    %v651 = vunpack.c.l.b16 %v76
    %v652 = vunpack.c.l.b16 %v77
    %v653 = vunpack.c.l.b16 %v78
    %v654 = vunpack.c.l.b16 %v79
    %v655 = vunpack.c.l.b16 %v80
    %v656 = vunpack.c.l.b16 %v81
    %v657 = vunpack.c.l.b16 %v82
    %v658 = vunpack.c.l.b16 %v83
    %v659 = vunpack.c.l.b16 %v84
    %v660 = vunpack.c.l.b16 %v85
    %v661 = vunpack.c.l.b16 %v86
    %v662 = vunpack.c.l.b16 %v87
    %v663 = vunpack.c.l.b16 %v88
    %v664 = vunpack.c.l.b16 %v89
    %v665 = vunpack.c.l.b16 %v90
    %v666 = vunpack.c.l.b16 %v91
    %v667 = vunpack.c.l.b16 %v92
    %v668 = vunpack.c.l.b16 %v93
    %v669 = vunpack.c.l.b16 %v94
    %v670 = vunpack.c.l.b16 %v95
    %v671 = vunpack.c.l.b16 %v96
    %v672 = vunpack.c.l.b16 %v97
    %v673 = vunpack.c.l.b16 %v98
    %v674 = vunpack.c.l.b16 %v99
    %v675 = vunpack.c.l.b16 %v100
    %v676 = vunpack.c.l.b16 %v101
    %v677 = vunpack.c.l.b16 %v102
    %v678 = vunpack.c.l.b16 %v103
    %v679 = vunpack.c.l.b16 %v104
    %v680 = vunpack.c.l.b16 %v105
    %v681 = vunpack.c.l.b16 %v106
    %v682 = vunpack.c.l.b16 %v107
    %v683 = vunpack.c.l.b16 %v108
    %v684 = vunpack.c.l.b16 %v109
    %v685 = vunpack.c.l.b16 %v110
    %v686 = vunpack.c.l.b16 %v111
    %v687 = vunpack.c.l.b16 %v112
    %v688 = vunpack.c.l.b16 %v113
    %v689 = vunpack.c.l.b16 %v114
    %v690 = vunpack.c.l.b16 %v115
    %v691 = vunpack.c.l.b16 %v116
    %v692 = vunpack.c.l.b16 %v117
    %v693 = vunpack.c.l.b16 %v118
    %v694 = vunpack.c.l.b16 %v119
    %v695 = vunpack.c.l.b16 %v120
    %v696 = vunpack.c.l.b16 %v121
    %v697 = vunpack.c.l.b16 %v122
    %v698 = vunpack.c.l.b16 %v123
    %v699 = vunpack.c.l.b16 %v124
    %v700 = vunpack.c.l.b16 %v125
    %v701 = vunpack.c.l.b16 %v126
    %v702 = vunpack.c.l.b16 %v127
    %v703 = vunpack.c.l.b16 %v128
    %v704 = vunpack.c.l.b16 %v129
    %v705 = vunpack.c.l.b16 %v130
    %v706 = vunpack.c.l.b16 %v131
    %v707 = vunpack.c.l.b16 %v132
    %v708 = vunpack.c.l.b16 %v133
    %v709 = vunpack.c.l.b16 %v134
    %v710 = vunpack.c.l.b16 %v135
    %v711 = vunpack.c.l.b16 %v136
    %v712 = vunpack.c.l.b16 %v137
    %v713 = vunpack.c.l.b16 %v138
    %v714 = vunpack.c.l.b16 %v139
    %v715 = vunpack.c.l.b16 %v140
    %v716 = vunpack.c.l.b16 %v141
    %v717 = vunpack.c.l.b16 %v142
    %v718 = vunpack.c.l.b16 %v143
    %v719 = vunpack.c.l.b16 %v144
    %v720 = vunpack.c.l.b16 %v145
    %v721 = vunpack.c.l.b16 %v146
    %v722 = vunpack.c.l.b16 %v147
    %v723 = vunpack.c.l.b16 %v148
    %v724 = vunpack.c.l.b16 %v149
    %v725 = vunpack.c.l.b16 %v150
    %v726 = vunpack.c.l.b16 %v151
    %v727 = vunpack.c.l.b16 %v152
    %v728 = vunpack.c.l.b16 %v153
    %v729 = vunpack.c.l.b16 %v154
    %v730 = vunpack.c.l.b16 %v155
    %v731 = vunpack.c.l.b16 %v156
    %v732 = vunpack.c.l.b16 %v157
    %v733 = vunpack.c.l.b16 %v158
    %v734 = vunpack.c.l.b16 %v159
    %v735 = vunpack.c.l.b16 %v160
    %v736 = vunpack.c.l.b16 %v161
    %v737 = vunpack.c.l.b16 %v162
    %v738 = vunpack.c.l.b16 %v163
    %v739 = vunpack.c.l.b16 %v164
    %v740 = vunpack.c.l.b16 %v165
    %v741 = vunpack.c.l.b16 %v166
    %v742 = vunpack.c.l.b16 %v167
    %v743 = vunpack.c.l.b16 %v168
    %v744 = vunpack.c.l.b16 %v169
    %v745 = vunpack.c.l.b16 %v170
    %v746 = vunpack.c.l.b16 %v171
    %v747 = vunpack.c.l.b16 %v172
    %v748 = vunpack.c.l.b16 %v173
    %v749 = vunpack.c.l.b16 %v174
    %v750 = vunpack.c.l.b16 %v175
    %v751 = vunpack.c.l.b16 %v176
    %v752 = vunpack.c.l.b16 %v177
    %v753 = vunpack.c.l.b16 %v178
    %v754 = vunpack.c.l.b16 %v179
    %v755 = vunpack.c.l.b16 %v180
    %v756 = vunpack.c.l.b16 %v181
    %v757 = vunpack.c.l.b16 %v182
    %v758 = vunpack.c.l.b16 %v183
    %v759 = vunpack.c.l.b16 %v184
    %v760 = vunpack.c.l.b16 %v185
    %v761 = vunpack.c.l.b16 %v186
    %v762 = vunpack.c.l.b16 %v187
    %v763 = vunpack.c.l.b16 %v188
    %v764 = vunpack.c.l.b16 %v189
    %v765 = vunpack.c.l.b16 %v190
    %v766 = vunpack.c.l.b16 %v191
    %v767 = vunpack.c.l.b16 %v192
    %v768 = vunpack.c.l.b16 %v193
    %v769 = vunpack.c.l.b16 %v194
    %v770 = vunpack.c.l.b16 %v195
    %v771 = vunpack.c.l.b16 %v196
    %v772 = vunpack.c.l.b16 %v197
    %v773 = vunpack.c.l.b16 %v198
    %v774 = vunpack.c.l.b16 %v199
    %v775 = vunpack.c.l.b16 %v200
    %v776 = vunpack.c.l.b16 %v201
    %v777 = vunpack.c.l.b16 %v202
    %v778 = vunpack.c.l.b16 %v203
    %v779 = vunpack.c.l.b16 %v204
    %v780 = vunpack.c.l.b16 %v205
    %v781 = vunpack.c.l.b16 %v206
    %v782 = vunpack.c.l.b16 %v207
    %v783 = vunpack.c.l.b16 %v208
    %v784 = vunpack.c.l.b16 %v209
    %v785 = vunpack.c.l.b16 %v210
    %v786 = vunpack.c.l.b16 %v211
    %v787 = vunpack.c.l.b16 %v212
    %v788 = vunpack.c.l.b16 %v213
    %v789 = vunpack.c.l.b16 %v214
    %v790 = vunpack.c.l.b16 %v215
    %v791 = vunpack.c.l.b16 %v216
    %v792 = vunpack.c.l.b16 %v217
    %v793 = vunpack.c.l.b16 %v218
    %v794 = vunpack.c.l.b16 %v219
    %v795 = vunpack.c.l.b16 %v220
    %v796 = vunpack.c.l.b16 %v221
    %v797 = vunpack.c.l.b16 %v222
    %v798 = vunpack.c.l.b16 %v223
    %v799 = vunpack.c.l.b16 %v224
    %v800 = vunpack.c.l.b16 %v225
    %v801 = vunpack.c.l.b16 %v226
    %v802 = vunpack.c.l.b16 %v227
    %v803 = vunpack.c.l.b16 %v228
    %v804 = vunpack.c.l.b16 %v229
    %v805 = vunpack.c.l.b16 %v230
    %v806 = vunpack.c.l.b16 %v231
    %v807 = vunpack.c.l.b16 %v232
    %v808 = vunpack.c.l.b16 %v233
    %v809 = vunpack.c.l.b16 %v234
    %v810 = vunpack.c.l.b16 %v235
    %v811 = vunpack.c.l.b16 %v236
    %v812 = vunpack.c.l.b16 %v237
    %v813 = vunpack.c.l.b16 %v238
    %v814 = vunpack.c.l.b16 %v239
    %v815 = vunpack.c.l.b16 %v240
    %v816 = vunpack.c.l.b16 %v241
    %v817 = vunpack.c.l.b16 %v242
    %v818 = vunpack.c.l.b16 %v243
    %v819 = vunpack.c.l.b16 %v244
    %v820 = vunpack.c.l.b16 %v245
    %v821 = vunpack.c.l.b16 %v246
    %v822 = vunpack.c.l.b16 %v247
    %v823 = vunpack.c.l.b16 %v248
    %v824 = vunpack.c.l.b16 %v249
    %v825 = vunpack.c.l.b16 %v250
    %v826 = vunpack.c.l.b16 %v251
    %v827 = vunpack.c.l.b16 %v252
    %v828 = vunpack.c.l.b16 %v253
    %v829 = vunpack.c.l.b16 %v254
    %v830 = vunpack.c.l.b16 %v255
    %v831 = vunpack.c.l.b16 %v256
    %v832 = vunpack.c.l.b16 %v257
    %v833 = vunpack.c.l.b16 %v258
    %v834 = vunpack.c.l.b16 %v259
    %v835 = vunpack.c.l.b16 %v260
    %v836 = vunpack.c.l.b16 %v261
    %v837 = vunpack.c.l.b16 %v262
    %v838 = vunpack.c.l.b16 %v263
    %v839 = vunpack.c.l.b16 %v264
    %v840 = vunpack.c.l.b16 %v265
    %v841 = vunpack.c.l.b16 %v266
    %v842 = vunpack.c.l.b16 %v267
    %v843 = vunpack.c.l.b16 %v268
    %v844 = vunpack.c.l.b16 %v269
    %v845 = vunpack.c.l.b16 %v270
    %v846 = vunpack.c.l.b16 %v271
    %v847 = vunpack.c.l.b16 %v272
    %v848 = vunpack.c.l.b16 %v273
    %v849 = vunpack.c.l.b16 %v274
    %v850 = vunpack.c.l.b16 %v275
    %v851 = vunpack.c.l.b16 %v276
    %v852 = vunpack.c.l.b16 %v277
    %v853 = vunpack.c.l.b16 %v278
    %v854 = vunpack.c.l.b16 %v279
    %v855 = vunpack.c.l.b16 %v280
    %v856 = vunpack.c.l.b16 %v281
    %v857 = vunpack.c.l.b16 %v282
    %v858 = vunpack.c.l.b16 %v283
    %v859 = vunpack.c.l.b16 %v284
    %v860 = vunpack.c.l.b16 %v285
    %v861 = vunpack.c.l.b16 %v286
    %v862 = vunpack.c.l.b16 %v287
    %v863 = vunpack.c.l.b16 %v288
    %v864 = vunpack.c.l.b16 %v289
    %v865 = vunpack.c.l.b16 %v290
    %v866 = vunpack.c.l.b16 %v291
    %v867 = vunpack.c.l.b16 %v292
    %v868 = vunpack.c.l.b16 %v293
    %v869 = vpack.c.b16 %v614, %v613
    %v870 = vpack.c.b16 %v616, %v615
    %v871 = vpack.c.b16 %v618, %v617
    %v872 = vpack.c.b16 %v620, %v619
    %v873 = vpack.c.b16 %v622, %v621
    %v874 = vpack.c.b16 %v624, %v623
    %v875 = vpack.c.b16 %v626, %v625
    %v876 = vpack.c.b16 %v628, %v627
    %v877 = vpack.c.b16 %v630, %v629
    %v878 = vpack.c.b16 %v632, %v631
    %v879 = vpack.c.b16 %v634, %v633
    %v880 = vpack.c.b16 %v636, %v635
    %v881 = vpack.c.b16 %v638, %v637
    %v882 = vpack.c.b16 %v640, %v639
    %v883 = vpack.c.b16 %v642, %v641
    %v884 = vpack.c.b16 %v644, %v643
    %v885 = vpack.c.b16 %v646, %v645
    %v886 = vpack.c.b16 %v648, %v647
    %v887 = vpack.c.b16 %v650, %v649
    %v888 = vpack.c.b16 %v652, %v651
    %v889 = vpack.c.b16 %v654, %v653
    %v890 = vpack.c.b16 %v656, %v655
    %v891 = vpack.c.b16 %v658, %v657
    %v892 = vpack.c.b16 %v660, %v659
    %v893 = vpack.c.b16 %v662, %v661
    %v894 = vpack.c.b16 %v664, %v663
    %v895 = vpack.c.b16 %v666, %v665
    %v896 = vpack.c.b16 %v668, %v667
    %v897 = vpack.c.b16 %v670, %v669
    %v898 = vpack.c.b16 %v672, %v671
    %v899 = vpack.c.b16 %v674, %v673
    %v900 = vpack.c.b16 %v676, %v675
    %v901 = vpack.c.b16 %v678, %v677
    %v902 = vpack.c.b16 %v680, %v679
    %v903 = vpack.c.b16 %v682, %v681
    %v904 = vpack.c.b16 %v684, %v683
    %v905 = vpack.c.b16 %v686, %v685
    %v906 = vpack.c.b16 %v688, %v687
    %v907 = vpack.c.b16 %v690, %v689
    %v908 = vpack.c.b16 %v692, %v691
    %v909 = vpack.c.b16 %v694, %v693
    %v910 = vpack.c.b16 %v696, %v695
    %v911 = vpack.c.b16 %v698, %v697
    %v912 = vpack.c.b16 %v700, %v699
    %v913 = vpack.c.b16 %v702, %v701
    %v914 = vpack.c.b16 %v704, %v703
    %v915 = vpack.c.b16 %v706, %v705
    %v916 = vpack.c.b16 %v708, %v707
    %v917 = vpack.c.b16 %v710, %v709
    %v918 = vpack.c.b16 %v712, %v711
    %v919 = vpack.c.b16 %v714, %v713
    %v920 = vpack.c.b16 %v716, %v715
    %v921 = vpack.c.b16 %v718, %v717
    %v922 = vpack.c.b16 %v720, %v719
    %v923 = vpack.c.b16 %v722, %v721
    %v924 = vpack.c.b16 %v724, %v723
    %v925 = vpack.c.b16 %v726, %v725
    %v926 = vpack.c.b16 %v728, %v727
    %v927 = vpack.c.b16 %v730, %v729
    %v928 = vpack.c.b16 %v732, %v731
    %v929 = vpack.c.b16 %v734, %v733
    %v930 = vpack.c.b16 %v736, %v735
    %v931 = vpack.c.b16 %v738, %v737
    %v932 = vpack.c.b16 %v740, %v739
    %v933 = vpack.c.b16 %v742, %v741
    %v934 = vpack.c.b16 %v744, %v743
    %v935 = vpack.c.b16 %v746, %v745
    %v936 = vpack.c.b16 %v748, %v747
    %v937 = vpack.c.b16 %v750, %v749
    %v938 = vpack.c.b16 %v752, %v751
    %v939 = vpack.c.b16 %v754, %v753
    %v940 = vpack.c.b16 %v756, %v755
    %v941 = vpack.c.b16 %v758, %v757
    %v942 = vpack.c.b16 %v760, %v759
    %v943 = vpack.c.b16 %v762, %v761
    %v944 = vpack.c.b16 %v764, %v763
    %v945 = vpack.c.b16 %v766, %v765
    %v946 = vpack.c.b16 %v768, %v767
    %v947 = vpack.c.b16 %v770, %v769
    %v948 = vpack.c.b16 %v772, %v771
    %v949 = vpack.c.b16 %v774, %v773
    %v950 = vpack.c.b16 %v776, %v775
    %v951 = vpack.c.b16 %v778, %v777
    %v952 = vpack.c.b16 %v780, %v779
    %v953 = vpack.c.b16 %v782, %v781
    %v954 = vpack.c.b16 %v784, %v783
    %v955 = vpack.c.b16 %v786, %v785
    %v956 = vpack.c.b16 %v788, %v787
    %v957 = vpack.c.b16 %v790, %v789
    %v958 = vpack.c.b16 %v792, %v791
    %v959 = vpack.c.b16 %v794, %v793
    %v960 = vpack.c.b16 %v796, %v795
    %v961 = vpack.c.b16 %v798, %v797
    %v962 = vpack.c.b16 %v800, %v799
    %v963 = vpack.c.b16 %v802, %v801
    %v964 = vpack.c.b16 %v804, %v803
    %v965 = vpack.c.b16 %v806, %v805
    %v966 = vpack.c.b16 %v808, %v807
    %v967 = vpack.c.b16 %v810, %v809
    %v968 = vpack.c.b16 %v812, %v811
    %v969 = vpack.c.b16 %v814, %v813
    %v970 = vpack.c.b16 %v816, %v815
    %v971 = vpack.c.b16 %v818, %v817
    %v972 = vpack.c.b16 %v820, %v819
    %v973 = vpack.c.b16 %v822, %v821
    %v974 = vpack.c.b16 %v824, %v823
    %v975 = vpack.c.b16 %v826, %v825
    %v976 = vpack.c.b16 %v828, %v827
    %v977 = vpack.c.b16 %v830, %v829
    %v978 = vpack.c.b16 %v832, %v831
    %v979 = vpack.c.b16 %v834, %v833
    %v980 = vpack.c.b16 %v836, %v835
    %v981 = vpack.c.b16 %v838, %v837
    %v982 = vpack.c.b16 %v840, %v839
    %v983 = vpack.c.b16 %v842, %v841
    %v984 = vpack.c.b16 %v844, %v843
    %v985 = vpack.c.b16 %v846, %v845
    %v986 = vpack.c.b16 %v848, %v847
    %v987 = vpack.c.b16 %v850, %v849
    %v988 = vpack.c.b16 %v852, %v851
    %v989 = vpack.c.b16 %v854, %v853
    %v990 = vpack.c.b16 %v856, %v855
    %v991 = vpack.c.b16 %v858, %v857
    %v992 = vpack.c.b16 %v860, %v859
    %v993 = vpack.c.b16 %v862, %v861
    %v994 = vpack.c.b16 %v864, %v863
    %v995 = vpack.c.b16 %v866, %v865
    %v996 = vpack.c.b16 %v868, %v867
    %1125 = vmatprep.subr.bf16.mxu0 0
    %1126 = vmatpush1.bf16.msra.mxu0 %v869
    %1127 = vmatprep.subr.bf16.mxu0 0
    %1128 = vmatpush1.bf16.msra.mxu0 %v870
    %1129 = vmatprep.subr.bf16.mxu0 0
    %1130 = vmatpush1.bf16.msra.mxu0 %v871
    %1131 = vmatprep.subr.bf16.mxu0 0
    %1132 = vmatpush1.bf16.msra.mxu0 %v872
    %1133 = vmatprep.subr.bf16.mxu0 0
    %1134 = vmatpush1.bf16.msra.mxu0 %v873
    %1135 = vmatprep.subr.bf16.mxu0 0
    %1136 = vmatpush1.bf16.msra.mxu0 %v874
    %1137 = vmatprep.subr.bf16.mxu0 0
    %1138 = vmatpush1.bf16.msra.mxu0 %v875
    %1139 = vmatprep.subr.bf16.mxu0 0
    %1140 = vmatpush1.bf16.msra.mxu0 %v876
    %1141 = vmatprep.subr.bf16.mxu0 0
    %1142 = vmatpush1.bf16.msra.mxu0 %v877
    %1143 = vmatprep.subr.bf16.mxu0 0
    %1144 = vmatpush1.bf16.msra.mxu0 %v878
    %1145 = vmatprep.subr.bf16.mxu0 0
    %1146 = vmatpush1.bf16.msra.mxu0 %v879
    %1147 = vmatprep.subr.bf16.mxu0 0
    %1148 = vmatpush1.bf16.msra.mxu0 %v880
    %1149 = vmatprep.subr.bf16.mxu0 0
    %1150 = vmatpush1.bf16.msra.mxu0 %v881
    %1151 = vmatprep.subr.bf16.mxu0 0
    %1152 = vmatpush1.bf16.msra.mxu0 %v882
    %1153 = vmatprep.subr.bf16.mxu0 0
    %1154 = vmatpush1.bf16.msra.mxu0 %v883
    %1155 = vmatprep.subr.bf16.mxu0 0
    %1156 = vmatpush1.bf16.msra.mxu0 %v884
    %1157 = vmatprep.mubr.bf16.mxu0 %v326
    %1158 = vmatmul.mubr.bf16.gmra.mrb[0].mxu0 %v325
    %v1159 = vpop.f32.mrb[0].mxu0
    %v1160 = vadd.f32 %v299, %v1159
    %v1161 = vpop.f32.mrb[0].mxu0
    %v1162 = vpop.f32.mrb[0].mxu0
    %v1163 = vpop.f32.mrb[0].mxu0
    %1164 = vdwg.mxu0
    %1165 = vmatprep.subr.bf16.mxu0 0
    %1166 = vmatpush1.bf16.msra.mxu0 %v885
    %1167 = vmatprep.subr.bf16.mxu0 0
    %1168 = vmatpush1.bf16.msra.mxu0 %v886
    %1169 = vmatprep.subr.bf16.mxu0 0
    %1170 = vmatpush1.bf16.msra.mxu0 %v887
    %1171 = vmatprep.subr.bf16.mxu0 0
    %1172 = vmatpush1.bf16.msra.mxu0 %v888
    %1173 = vmatprep.subr.bf16.mxu0 0
    %1174 = vmatpush1.bf16.msra.mxu0 %v889
    %1175 = vmatprep.subr.bf16.mxu0 0
    %1176 = vmatpush1.bf16.msra.mxu0 %v890
    %1177 = vmatprep.subr.bf16.mxu0 0
    %1178 = vmatpush1.bf16.msra.mxu0 %v891
    %1179 = vmatprep.subr.bf16.mxu0 0
    %1180 = vmatpush1.bf16.msra.mxu0 %v892
    %1181 = vmatprep.subr.bf16.mxu0 0
    %1182 = vmatpush1.bf16.msra.mxu0 %v893
    %1183 = vmatprep.subr.bf16.mxu0 0
    %1184 = vmatpush1.bf16.msra.mxu0 %v894
    %1185 = vmatprep.subr.bf16.mxu0 0
    %1186 = vmatpush1.bf16.msra.mxu0 %v895
    %1187 = vmatprep.subr.bf16.mxu0 0
    %1188 = vmatpush1.bf16.msra.mxu0 %v896
    %1189 = vmatprep.subr.bf16.mxu0 0
    %1190 = vmatpush1.bf16.msra.mxu0 %v897
    %1191 = vmatprep.subr.bf16.mxu0 0
    %1192 = vmatpush1.bf16.msra.mxu0 %v898
    %1193 = vmatprep.subr.bf16.mxu0 0
    %1194 = vmatpush1.bf16.msra.mxu0 %v899
    %1195 = vmatprep.subr.bf16.mxu0 0
    %1196 = vmatpush1.bf16.msra.mxu0 %v900
    %1197 = vmatprep.mubr.bf16.mxu0 %v328
    %1198 = vmatmul.mubr.bf16.gmra.mrb[0].mxu0 %v327
    %v1199 = vpop.f32.mrb[0].mxu0
    %v1200 = vadd.f32 %v1160, %v1199
    %v1201 = vpop.f32.mrb[0].mxu0
    %v1202 = vpop.f32.mrb[0].mxu0
    %v1203 = vpop.f32.mrb[0].mxu0
    %1204 = vdwg.mxu0
    %1205 = vmatprep.subr.bf16.mxu0 0
    %1206 = vmatpush1.bf16.msra.mxu0 %v901
    %1207 = vmatprep.subr.bf16.mxu0 0
    %1208 = vmatpush1.bf16.msra.mxu0 %v902
    %1209 = vmatprep.subr.bf16.mxu0 0
    %1210 = vmatpush1.bf16.msra.mxu0 %v903
    %1211 = vmatprep.subr.bf16.mxu0 0
    %1212 = vmatpush1.bf16.msra.mxu0 %v904
    %1213 = vmatprep.subr.bf16.mxu0 0
    %1214 = vmatpush1.bf16.msra.mxu0 %v905
    %1215 = vmatprep.subr.bf16.mxu0 0
    %1216 = vmatpush1.bf16.msra.mxu0 %v906
    %1217 = vmatprep.subr.bf16.mxu0 0
    %1218 = vmatpush1.bf16.msra.mxu0 %v907
    %1219 = vmatprep.subr.bf16.mxu0 0
    %1220 = vmatpush1.bf16.msra.mxu0 %v908
    %1221 = vmatprep.subr.bf16.mxu0 0
    %1222 = vmatpush1.bf16.msra.mxu0 %v909
    %1223 = vmatprep.subr.bf16.mxu0 0
    %1224 = vmatpush1.bf16.msra.mxu0 %v910
    %1225 = vmatprep.subr.bf16.mxu0 0
    %1226 = vmatpush1.bf16.msra.mxu0 %v911
    %1227 = vmatprep.subr.bf16.mxu0 0
    %1228 = vmatpush1.bf16.msra.mxu0 %v912
    %1229 = vmatprep.subr.bf16.mxu0 0
    %1230 = vmatpush1.bf16.msra.mxu0 %v913
    %1231 = vmatprep.subr.bf16.mxu0 0
    %1232 = vmatpush1.bf16.msra.mxu0 %v914
    %1233 = vmatprep.subr.bf16.mxu0 0
    %1234 = vmatpush1.bf16.msra.mxu0 %v915
    %1235 = vmatprep.subr.bf16.mxu0 0
    %1236 = vmatpush1.bf16.msra.mxu0 %v916
    %1237 = vmatprep.mubr.bf16.mxu0 %v330
    %1238 = vmatmul.mubr.bf16.gmra.mrb[0].mxu0 %v329
    %v1239 = vpop.f32.mrb[0].mxu0
    %v1240 = vadd.f32 %v1200, %v1239
    %v1241 = vpop.f32.mrb[0].mxu0
    %v1242 = vpop.f32.mrb[0].mxu0
    %v1243 = vpop.f32.mrb[0].mxu0
    %1244 = vdwg.mxu0
    %1245 = vmatprep.subr.bf16.mxu0 0
    %1246 = vmatpush1.bf16.msra.mxu0 %v917
    %1247 = vmatprep.subr.bf16.mxu0 0
    %1248 = vmatpush1.bf16.msra.mxu0 %v918
    %1249 = vmatprep.subr.bf16.mxu0 0
    %1250 = vmatpush1.bf16.msra.mxu0 %v919
    %1251 = vmatprep.subr.bf16.mxu0 0
    %1252 = vmatpush1.bf16.msra.mxu0 %v920
    %1253 = vmatprep.subr.bf16.mxu0 0
    %1254 = vmatpush1.bf16.msra.mxu0 %v921
    %1255 = vmatprep.subr.bf16.mxu0 0
    %1256 = vmatpush1.bf16.msra.mxu0 %v922
    %1257 = vmatprep.subr.bf16.mxu0 0
    %1258 = vmatpush1.bf16.msra.mxu0 %v923
    %1259 = vmatprep.subr.bf16.mxu0 0
    %1260 = vmatpush1.bf16.msra.mxu0 %v924
    %1261 = vmatprep.subr.bf16.mxu0 0
    %1262 = vmatpush1.bf16.msra.mxu0 %v925
    %1263 = vmatprep.subr.bf16.mxu0 0
    %1264 = vmatpush1.bf16.msra.mxu0 %v926
    %1265 = vmatprep.subr.bf16.mxu0 0
    %1266 = vmatpush1.bf16.msra.mxu0 %v927
    %1267 = vmatprep.subr.bf16.mxu0 0
    %1268 = vmatpush1.bf16.msra.mxu0 %v928
    %1269 = vmatprep.subr.bf16.mxu0 0
    %1270 = vmatpush1.bf16.msra.mxu0 %v929
    %1271 = vmatprep.subr.bf16.mxu0 0
    %1272 = vmatpush1.bf16.msra.mxu0 %v930
    %1273 = vmatprep.subr.bf16.mxu0 0
    %1274 = vmatpush1.bf16.msra.mxu0 %v931
    %1275 = vmatprep.subr.bf16.mxu0 0
    %1276 = vmatpush1.bf16.msra.mxu0 %v932
    %1277 = vmatprep.mubr.bf16.mxu0 %v332
    %1278 = vmatmul.mubr.bf16.gmra.mrb[0].mxu0 %v331
    %v1279 = vpop.f32.mrb[0].mxu0
    %v1280 = vadd.f32 %v1240, %v1279
    %v1281 = vpop.f32.mrb[0].mxu0
    %v1282 = vpop.f32.mrb[0].mxu0
    %v1283 = vpop.f32.mrb[0].mxu0
    %1284 = vdwg.mxu0
    %1285 = vmatprep.subr.bf16.mxu0 0
    %1286 = vmatpush1.bf16.msra.mxu0 %v933
    %1287 = vmatprep.subr.bf16.mxu0 0
    %1288 = vmatpush1.bf16.msra.mxu0 %v934
    %1289 = vmatprep.subr.bf16.mxu0 0
    %1290 = vmatpush1.bf16.msra.mxu0 %v935
    %1291 = vmatprep.subr.bf16.mxu0 0
    %1292 = vmatpush1.bf16.msra.mxu0 %v936
    %1293 = vmatprep.subr.bf16.mxu0 0
    %1294 = vmatpush1.bf16.msra.mxu0 %v937
    %1295 = vmatprep.subr.bf16.mxu0 0
    %1296 = vmatpush1.bf16.msra.mxu0 %v938
    %1297 = vmatprep.subr.bf16.mxu0 0
    %1298 = vmatpush1.bf16.msra.mxu0 %v939
    %1299 = vmatprep.subr.bf16.mxu0 0
    %1300 = vmatpush1.bf16.msra.mxu0 %v940
    %1301 = vmatprep.subr.bf16.mxu0 0
    %1302 = vmatpush1.bf16.msra.mxu0 %v941
    %1303 = vmatprep.subr.bf16.mxu0 0
    %1304 = vmatpush1.bf16.msra.mxu0 %v942
    %1305 = vmatprep.subr.bf16.mxu0 0
    %1306 = vmatpush1.bf16.msra.mxu0 %v943
    %1307 = vmatprep.subr.bf16.mxu0 0
    %1308 = vmatpush1.bf16.msra.mxu0 %v944
    %1309 = vmatprep.subr.bf16.mxu0 0
    %1310 = vmatpush1.bf16.msra.mxu0 %v945
    %1311 = vmatprep.subr.bf16.mxu0 0
    %1312 = vmatpush1.bf16.msra.mxu0 %v946
    %1313 = vmatprep.subr.bf16.mxu0 0
    %1314 = vmatpush1.bf16.msra.mxu0 %v947
    %1315 = vmatprep.subr.bf16.mxu0 0
    %1316 = vmatpush1.bf16.msra.mxu0 %v948
    %1317 = vmatprep.mubr.bf16.mxu0 %v334
    %1318 = vmatmul.mubr.bf16.gmra.mrb[0].mxu0 %v333
    %v1319 = vpop.f32.mrb[0].mxu0
    %v1320 = vadd.f32 %v1280, %v1319
    %v1321 = vpop.f32.mrb[0].mxu0
    %v1322 = vpop.f32.mrb[0].mxu0
    %v1323 = vpop.f32.mrb[0].mxu0
    %1324 = vdwg.mxu0
    %1325 = vmatprep.subr.bf16.mxu0 0
    %1326 = vmatpush1.bf16.msra.mxu0 %v949
    %1327 = vmatprep.subr.bf16.mxu0 0
    %1328 = vmatpush1.bf16.msra.mxu0 %v950
    %1329 = vmatprep.subr.bf16.mxu0 0
    %1330 = vmatpush1.bf16.msra.mxu0 %v951
    %1331 = vmatprep.subr.bf16.mxu0 0
    %1332 = vmatpush1.bf16.msra.mxu0 %v952
    %1333 = vmatprep.subr.bf16.mxu0 0
    %1334 = vmatpush1.bf16.msra.mxu0 %v953
    %1335 = vmatprep.subr.bf16.mxu0 0
    %1336 = vmatpush1.bf16.msra.mxu0 %v954
    %1337 = vmatprep.subr.bf16.mxu0 0
    %1338 = vmatpush1.bf16.msra.mxu0 %v955
    %1339 = vmatprep.subr.bf16.mxu0 0
    %1340 = vmatpush1.bf16.msra.mxu0 %v956
    %1341 = vmatprep.subr.bf16.mxu0 0
    %1342 = vmatpush1.bf16.msra.mxu0 %v957
    %1343 = vmatprep.subr.bf16.mxu0 0
    %1344 = vmatpush1.bf16.msra.mxu0 %v958
    %1345 = vmatprep.subr.bf16.mxu0 0
    %1346 = vmatpush1.bf16.msra.mxu0 %v959
    %1347 = vmatprep.subr.bf16.mxu0 0
    %1348 = vmatpush1.bf16.msra.mxu0 %v960
    %1349 = vmatprep.subr.bf16.mxu0 0
    %1350 = vmatpush1.bf16.msra.mxu0 %v961
    %1351 = vmatprep.subr.bf16.mxu0 0
    %1352 = vmatpush1.bf16.msra.mxu0 %v962
    %1353 = vmatprep.subr.bf16.mxu0 0
    %1354 = vmatpush1.bf16.msra.mxu0 %v963
    %1355 = vmatprep.subr.bf16.mxu0 0
    %1356 = vmatpush1.bf16.msra.mxu0 %v964
    %1357 = vmatprep.mubr.bf16.mxu0 %v336
    %1358 = vmatmul.mubr.bf16.gmra.mrb[0].mxu0 %v335
    %v1359 = vpop.f32.mrb[0].mxu0
    %v1360 = vadd.f32 %v1320, %v1359
    %v1361 = vpop.f32.mrb[0].mxu0
    %v1362 = vpop.f32.mrb[0].mxu0
    %v1363 = vpop.f32.mrb[0].mxu0
    %1364 = vdwg.mxu0
    %1365 = vmatprep.subr.bf16.mxu0 0
    %1366 = vmatpush1.bf16.msra.mxu0 %v965
    %1367 = vmatprep.subr.bf16.mxu0 0
    %1368 = vmatpush1.bf16.msra.mxu0 %v966
    %1369 = vmatprep.subr.bf16.mxu0 0
    %1370 = vmatpush1.bf16.msra.mxu0 %v967
    %1371 = vmatprep.subr.bf16.mxu0 0
    %1372 = vmatpush1.bf16.msra.mxu0 %v968
    %1373 = vmatprep.subr.bf16.mxu0 0
    %1374 = vmatpush1.bf16.msra.mxu0 %v969
    %1375 = vmatprep.subr.bf16.mxu0 0
    %1376 = vmatpush1.bf16.msra.mxu0 %v970
    %1377 = vmatprep.subr.bf16.mxu0 0
    %1378 = vmatpush1.bf16.msra.mxu0 %v971
    %1379 = vmatprep.subr.bf16.mxu0 0
    %1380 = vmatpush1.bf16.msra.mxu0 %v972
    %1381 = vmatprep.subr.bf16.mxu0 0
    %1382 = vmatpush1.bf16.msra.mxu0 %v973
    %1383 = vmatprep.subr.bf16.mxu0 0
    %1384 = vmatpush1.bf16.msra.mxu0 %v974
    %1385 = vmatprep.subr.bf16.mxu0 0
    %1386 = vmatpush1.bf16.msra.mxu0 %v975
    %1387 = vmatprep.subr.bf16.mxu0 0
    %1388 = vmatpush1.bf16.msra.mxu0 %v976
    %1389 = vmatprep.subr.bf16.mxu0 0
    %1390 = vmatpush1.bf16.msra.mxu0 %v977
    %1391 = vmatprep.subr.bf16.mxu0 0
    %1392 = vmatpush1.bf16.msra.mxu0 %v978
    %1393 = vmatprep.subr.bf16.mxu0 0
    %1394 = vmatpush1.bf16.msra.mxu0 %v979
    %1395 = vmatprep.subr.bf16.mxu0 0
    %1396 = vmatpush1.bf16.msra.mxu0 %v980
    %1397 = vmatprep.mubr.bf16.mxu0 %v338
    %1398 = vmatmul.mubr.bf16.gmra.mrb[0].mxu0 %v337
    %v1399 = vpop.f32.mrb[0].mxu0
    %v1400 = vadd.f32 %v1360, %v1399
    %v1401 = vpop.f32.mrb[0].mxu0
    %v1402 = vpop.f32.mrb[0].mxu0
    %v1403 = vpop.f32.mrb[0].mxu0
    %1404 = vdwg.mxu0
    %1405 = vmatprep.subr.bf16.mxu0 0
    %1406 = vmatpush1.bf16.msra.mxu0 %v981
    %1407 = vmatprep.subr.bf16.mxu0 0
    %1408 = vmatpush1.bf16.msra.mxu0 %v982
    %1409 = vmatprep.subr.bf16.mxu0 0
    %1410 = vmatpush1.bf16.msra.mxu0 %v983
    %1411 = vmatprep.subr.bf16.mxu0 0
    %1412 = vmatpush1.bf16.msra.mxu0 %v984
    %1413 = vmatprep.subr.bf16.mxu0 0
    %1414 = vmatpush1.bf16.msra.mxu0 %v985
    %1415 = vmatprep.subr.bf16.mxu0 0
    %1416 = vmatpush1.bf16.msra.mxu0 %v986
    %1417 = vmatprep.subr.bf16.mxu0 0
    %1418 = vmatpush1.bf16.msra.mxu0 %v987
    %1419 = vmatprep.subr.bf16.mxu0 0
    %1420 = vmatpush1.bf16.msra.mxu0 %v988
    %1421 = vmatprep.subr.bf16.mxu0 0
    %1422 = vmatpush1.bf16.msra.mxu0 %v989
    %1423 = vmatprep.subr.bf16.mxu0 0
    %1424 = vmatpush1.bf16.msra.mxu0 %v990
    %1425 = vmatprep.subr.bf16.mxu0 0
    %1426 = vmatpush1.bf16.msra.mxu0 %v991
    %1427 = vmatprep.subr.bf16.mxu0 0
    %1428 = vmatpush1.bf16.msra.mxu0 %v992
    %1429 = vmatprep.subr.bf16.mxu0 0
    %1430 = vmatpush1.bf16.msra.mxu0 %v993
    %1431 = vmatprep.subr.bf16.mxu0 0
    %1432 = vmatpush1.bf16.msra.mxu0 %v994
    %1433 = vmatprep.subr.bf16.mxu0 0
    %1434 = vmatpush1.bf16.msra.mxu0 %v995
    %1435 = vmatprep.subr.bf16.mxu0 0
    %1436 = vmatpush1.bf16.msra.mxu0 %v996
    %1437 = vmatprep.mubr.bf16.mxu0 %v340
    %1438 = vmatmul.mubr.bf16.gmra.mrb[0].mxu0 %v339
    %v1439 = vpop.f32.mrb[0].mxu0
    %v1440 = vadd.f32 %v1400, %v1439
    %v1441 = vpop.f32.mrb[0].mxu0
    %v1442 = vpop.f32.mrb[0].mxu0
    %v1443 = vpop.f32.mrb[0].mxu0
    %1444 = vdwg.mxu0
    %v1445 = vsub.f32 0.0, %v1440
    %v1446 = vmul.f32 %v1445, 1.442695
    %v1447 = vpow.pop %v1446
    %v1448 = vadd.f32 %v1447, 1.0
    %v1449 = vrcp.pop %v1448
    %1450 = vst [vmem:[#allocation5] sm:$0xff] %v1449
    // Predicated region
    $region18: #{_forward_stacked.1} parent=1 // pred_check
      _
    $region19: #{_forward_stacked.1} parent=1 // pred_check_branch
      %1452 = sbr.rel (0) target = $region21
    $region20: #{_forward_stacked.1} parent=1 // pred_region
      %s1454 = ssub.s32 128, 128
      %1455 = vsyncadd [#allocation4], %s1454
      %s1457 = sshll.u32 [#allocation5], 4
      %s1458 = int_to_ptr.vmem [resolvable:$true] %s1457
      %1460 = dma.vmem_to_hbm [thread:$0]  %s1458, 128, %s3, [#allocation4]
    $region21: #{_forward_stacked.1} parent=1 // pred_fallthru
      _
    // Predicated region
    $region22: #{_forward_stacked.1} parent=1 // pred_check
      _
    $region23: #{_forward_stacked.1} parent=1 // pred_check_branch
      %1462 = sbr.rel (0) target = $region25
    $region24: #{_forward_stacked.1} parent=1 // pred_region
      %1463 = dma.done [#allocation4], 128
    $region25: #{_forward_stacked.1} parent=1 // pred_fallthru
      _
    %1464 = vsyncpa [#allocation3], 1
    %1465 = vsyncpa [#allocation4], 1

</llo_original>
